<compile_context>
chip_gen: v5e
topology: v5e:2x2
jax: 0.10.0
libtpu: 0.0.40
codegen_flags: <defaults>
</compile_context>

<pallas_src>
import functools

import jax
import jax.numpy as jnp
from jax.experimental import pallas as pl
from jax.experimental.pallas import tpu as pltpu

BN_EPS = 1e-5


def _round_up(a, b):
    return (a + b - 1) // b * b


def _pad2d(a, rows, cols, dtype):
    a = jnp.asarray(a, dtype)
    r, c = a.shape
    if r == rows and c == cols:
        return a
    return jnp.zeros((rows, cols), dtype).at[:r, :c].set(a)


def _vmem_limits():
    """(vmem_limit_bytes for Mosaic, planning budget for the tiler)."""
    try:
        cap = int(pltpu.get_tpu_info().vmem_capacity_bytes)
    except Exception:
        cap = 64 * 1024 * 1024          # v7x worst case (per TensorCore)
    limit = min(int(cap * 0.80), 100 * 1024 * 1024)
    budget = int(limit * 0.85)          # leave headroom for compiler temporaries
    return limit, budget


def _choose_tiling(n, in_p, hid_p, out_p, mm_bytes, out_bytes, budget):
    """Pick the largest batch tile that fits the VMEM budget and decide whether
    the whole hidden activation h can stay resident in VMEM across phases."""
    min_tile = 16 if mm_bytes == 2 else 8            # bf16 min sublane tile = 16
    weights = 2 * (in_p * hid_p + hid_p * out_p) * mm_bytes   # double-buffered
    small = 4 * hid_p * 4 + 2 * (2 * hid_p + out_p) * 4       # stats + vectors

    def per_tile(nt):
        return (2 * nt * in_p * mm_bytes            # x tile (double-buffered)
                + 2 * nt * out_p * out_bytes        # out tile (double-buffered)
                + 3 * nt * hid_p * 4)               # f32 h / relu temporaries

    n_tile = min_tile
    for cand in (1024, 512, 256, 128, 64, 32, 16, 8):
        if cand < min_tile:
            break
        if weights + small + per_tile(cand) <= budget:
            n_tile = cand
            break
    n_tile = min(n_tile, _round_up(max(n, 1), min_tile))
    n_p = _round_up(max(n, 1), n_tile)
    num_tiles = n_p // n_tile
    keep_h = (weights + small + per_tile(n_tile) + n_p * hid_p * mm_bytes) <= budget
    return n_tile, n_p, num_tiles, keep_h


@functools.partial(jax.jit, static_argnames=("use_bf16_matmul",))
def projection_head(x, w1, b1, gamma, beta, w2, b2, *, use_bf16_matmul=True):
    """x: (N, in_dim) -> (N, out_dim); matches PyTorch ProjectionHead.forward
    in training mode (BatchNorm1d normalizes with batch statistics)."""
    del b1  # exact no-op: BN subtracts the per-feature batch mean right after
            # Linear-1, so a constant per-feature bias cancels identically.

    n, in_dim = x.shape
    hidden = w1.shape[1]
    out_dim = w2.shape[1]
    f32 = jnp.float32
    mm_dtype = jnp.bfloat16 if use_bf16_matmul else f32
    mm_bytes = 2 if use_bf16_matmul else 4
    out_dtype = x.dtype
    out_bytes = jnp.dtype(out_dtype).itemsize

    # lane-dense 128-padded feature dims
    in_p = _round_up(in_dim, 128)
    hid_p = _round_up(hidden, 128)
    out_p = _round_up(out_dim, 128)

    vmem_limit, budget = _vmem_limits()
    n_tile, n_p, num_tiles, keep_h = _choose_tiling(
        n, in_p, hid_p, out_p, mm_bytes, out_bytes, budget)

    # Pad directly in the matmul dtype (single pass over x, no f32 intermediate).
    # Zero-padded rows/cols are stats-safe: with no Linear-1 bias they produce
    # h == 0 and contribute nothing to sum / sumsq; we divide by the true n.
    x_mm = _pad2d(x, n_p, in_p, mm_dtype)
    w1_mm = _pad2d(w1, in_p, hid_p, mm_dtype)
    w2_mm = _pad2d(w2, hid_p, out_p, mm_dtype)
    gamma_p = _pad2d(jnp.reshape(gamma, (1, hidden)), 1, hid_p, f32)
    beta_p = _pad2d(jnp.reshape(beta, (1, hidden)), 1, hid_p, f32)
    b2_p = _pad2d(jnp.reshape(b2, (1, out_dim)), 1, out_p, f32)

    inv_n = 1.0 / float(n)  # true batch size, not padded

    def kernel(x_ref, w1_ref, gamma_ref, beta_ref, w2_ref, b2_ref, o_ref,
               sum_acc, sq_acc, scale_sc, shift_sc, *maybe_h):
        h_sc = maybe_h[0] if keep_h else None
        p = pl.program_id(0)
        i = pl.program_id(1)

        @pl.when(p == 0)
        def _phase0():
            h = jnp.dot(x_ref[...], w1_ref[...],
                        preferred_element_type=jnp.float32)

            @pl.when(i == 0)
            def _():
                sum_acc[...] = jnp.zeros_like(sum_acc)
                sq_acc[...] = jnp.zeros_like(sq_acc)

            sum_acc[...] += jnp.sum(h, axis=0, keepdims=True)
            sq_acc[...] += jnp.sum(h * h, axis=0, keepdims=True)

            if keep_h:
                row0 = pl.multiple_of(i * n_tile, n_tile)
                h_sc[pl.ds(row0, n_tile), :] = h.astype(h_sc.dtype)

            @pl.when(i == pl.num_programs(1) - 1)
            def _():
                # E[h^2] - mean^2 in f32; clamp guards tiny negative round-off.
                # TODO(synk): switch to shifted/Welford accumulation if
                # |mean| >> std regimes need tighter BN statistics.
                mean = sum_acc[...] * inv_n
                var = jnp.maximum(sq_acc[...] * inv_n - mean * mean, 0.0)
                scale = jax.lax.rsqrt(var + BN_EPS) * gamma_ref[...]  # EUP rsqrt
                scale_sc[...] = scale
                shift_sc[...] = beta_ref[...] - mean * scale

        @pl.when(p == 1)
        def _phase1():
            if keep_h:
                row0 = pl.multiple_of(i * n_tile, n_tile)
                h = h_sc[pl.ds(row0, n_tile), :].astype(jnp.float32)
            else:
                h = jnp.dot(x_ref[...], w1_ref[...],
                            preferred_element_type=jnp.float32)
            r = jnp.maximum(h * scale_sc[...] + shift_sc[...], 0.0)
            out = jnp.dot(r.astype(w2_ref.dtype), w2_ref[...],
                          preferred_element_type=jnp.float32)
            o_ref[...] = (out + b2_ref[...]).astype(o_ref.dtype)

    if keep_h:
        # phase 1 reads h from VMEM scratch -> pin x's block index so no new
        # x DMAs are issued during phase 1.
        x_map = lambda p, i: ((1 - p) * i, 0)
    else:
        # phase 1 recomputes x @ W1 (trades cheap MXU work for the h round-trip)
        x_map = lambda p, i: (i, 0)

    scratch = [pltpu.VMEM((1, hid_p), f32),   # sum
               pltpu.VMEM((1, hid_p), f32),   # sum of squares
               pltpu.VMEM((1, hid_p), f32),   # folded BN scale
               pltpu.VMEM((1, hid_p), f32)]   # folded BN shift
    if keep_h:
        scratch.append(pltpu.VMEM((n_p, hid_p), mm_dtype))  # resident hidden act

    matmul1 = 2 * n_p * in_p * hid_p
    flops = (matmul1 * (1 if keep_h else 2)
             + 7 * n_p * hid_p + 2 * n_p * hid_p * out_p)
    bytes_accessed = (n_p * in_p * mm_bytes * (1 if keep_h else 2)
                      + (in_p * hid_p + hid_p * out_p) * mm_bytes
                      + (2 * hid_p + out_p) * 4
                      + n_p * out_p * out_bytes)

    out_full = pl.pallas_call(
        kernel,
        out_shape=jax.ShapeDtypeStruct((n_p, out_p), out_dtype),
        grid_spec=pltpu.PrefetchScalarGridSpec(
            num_scalar_prefetch=0,
            grid=(2, num_tiles),               # phase-major: stats, then apply
            in_specs=[
                pl.BlockSpec((n_tile, in_p), x_map),
                pl.BlockSpec((in_p, hid_p), lambda p, i: (0, 0)),
                pl.BlockSpec((1, hid_p), lambda p, i: (0, 0)),
                pl.BlockSpec((1, hid_p), lambda p, i: (0, 0)),
                pl.BlockSpec((hid_p, out_p), lambda p, i: (0, 0)),
                pl.BlockSpec((1, out_p), lambda p, i: (0, 0)),
            ],
            # phase 0 parks the output on block (0,0) (no garbage writebacks);
            # phase 1 writes the real lane-dense tiles.
            out_specs=pl.BlockSpec((n_tile, out_p), lambda p, i: (p * i, 0)),
            scratch_shapes=scratch,
        ),
        compiler_params=pltpu.CompilerParams(
            # TODO(synk): phase-0 stats accumulation serializes the tile axis;
            # per-core partial sums would recover v7x's second TensorCore.
            dimension_semantics=("arbitrary", "arbitrary"),
            vmem_limit_bytes=int(vmem_limit),
        ),
        cost_estimate=pl.CostEstimate(
            flops=int(flops),
            transcendentals=int(hid_p),
            bytes_accessed=int(bytes_accessed)),
    )(x_mm, w1_mm, gamma_p, beta_p, w2_mm, b2_p)

    return out_full[:n, :out_dim]


def projection_head_ref(x, w1, b1, gamma, beta, w2, b2):
    """Pure-JAX reference matching PyTorch ProjectionHead.forward (train-mode BN)."""
    h = x @ w1 + b1
    mean = jnp.mean(h, axis=0, keepdims=True)
    var = jnp.mean((h - mean) ** 2, axis=0, keepdims=True)
    hn = (h - mean) / jnp.sqrt(var + BN_EPS) * gamma + beta
    r = jnp.maximum(hn, 0.0)
    return r @ w2 + b2


# TODO(synk): BatchNorm1d running_mean/running_var buffer updates are not
# emitted (only the train-mode forward activations); expose the batch mean/var
# as extra outputs if callers need the buffer update.

if __name__ == "__main__":
    # Small shapes consistent with the module: batch=8, in_dim=32, hidden=64, out=16.
    N, IN_DIM, HIDDEN_DIM, OUT_DIM = 8, 32, 64, 16

    key = jax.random.PRNGKey(0)
    kx, kw1, kb1, kw2, kb2 = jax.random.split(key, 5)

    x = jax.random.normal(kx, (N, IN_DIM), dtype=jnp.float32)

    # Deterministic parameter init (PyTorch-like uniform fan-in scaling).
    bound1 = 1.0 / (IN_DIM ** 0.5)
    w1 = jax.random.uniform(kw1, (IN_DIM, HIDDEN_DIM), jnp.float32, -bound1, bound1)
    b1 = jax.random.uniform(kb1, (1, HIDDEN_DIM), jnp.float32, -bound1, bound1)

    gamma = jnp.ones((1, HIDDEN_DIM), jnp.float32)   # BatchNorm1d weight
    beta = jnp.zeros((1, HIDDEN_DIM), jnp.float32)   # BatchNorm1d bias

    bound2 = 1.0 / (HIDDEN_DIM ** 0.5)
    w2 = jax.random.uniform(kw2, (HIDDEN_DIM, OUT_DIM), jnp.float32, -bound2, bound2)
    b2 = jax.random.uniform(kb2, (1, OUT_DIM), jnp.float32, -bound2, bound2)

    ref = projection_head_ref(x, w1, b1, gamma, beta, w2, b2)

    # Exact path (f32 MXU inputs) -> tight tolerance.
    out_f32 = projection_head(x, w1, b1, gamma, beta, w2, b2, use_bf16_matmul=False)
    jax.block_until_ready(out_f32)
    assert out_f32.shape == (N, OUT_DIM)
    assert jnp.allclose(out_f32, ref, atol=1e-4, rtol=1e-4), "f32 path mismatch"

    # Default fast path (bf16 MXU inputs, f32 accumulation) -> bf16-level tolerance.
    out_bf16 = projection_head(x, w1, b1, gamma, beta, w2, b2)
    jax.block_until_ready(out_bf16)
    assert out_bf16.shape == (N, OUT_DIM)
    assert jnp.allclose(out_bf16, ref, atol=1e-1, rtol=1e-1), "bf16 path mismatch"

    print("KERNEL_OK")
</pallas_src>

<mosaic_0001>
module attributes {stable_mosaic.version = 11 : i64} {
  func.func @kernel(%arg0: i32, %arg1: i32, %arg2: memref<8x128xf32, #tpu.memory_space<vmem>>, %arg3: memref<128x128xf32, #tpu.memory_space<vmem>>, %arg4: memref<1x128xf32, #tpu.memory_space<vmem>>, %arg5: memref<1x128xf32, #tpu.memory_space<vmem>>, %arg6: memref<128x128xf32, #tpu.memory_space<vmem>>, %arg7: memref<1x128xf32, #tpu.memory_space<vmem>>, %arg8: memref<8x128xf32, #tpu.memory_space<vmem>>, %arg9: memref<1x128xf32, #tpu.memory_space<vmem>>, %arg10: memref<1x128xf32, #tpu.memory_space<vmem>>, %arg11: memref<1x128xf32, #tpu.memory_space<vmem>>, %arg12: memref<1x128xf32, #tpu.memory_space<vmem>>, %arg13: memref<8x128xf32, #tpu.memory_space<vmem>>) attributes {dimension_semantics = [#tpu.dimension_semantics<arbitrary>, #tpu.dimension_semantics<arbitrary>], iteration_bounds = array<i64: 2, 1>, scalar_prefetch = 0 : i64, scratch_operands = 5 : i64, tpu.core_type = #tpu.core_type<tc>, window_params = [{transform_indices = @transform_0, window_bounds = array<i64: 8, 128>}, {pipeline_mode = #tpu.pipeline_mode<synchronous>, transform_indices = @transform_1, window_bounds = array<i64: 128, 128>}, {pipeline_mode = #tpu.pipeline_mode<synchronous>, transform_indices = @transform_2, window_bounds = array<i64: 1, 128>}, {pipeline_mode = #tpu.pipeline_mode<synchronous>, transform_indices = @transform_3, window_bounds = array<i64: 1, 128>}, {pipeline_mode = #tpu.pipeline_mode<synchronous>, transform_indices = @transform_4, window_bounds = array<i64: 128, 128>}, {pipeline_mode = #tpu.pipeline_mode<synchronous>, transform_indices = @transform_5, window_bounds = array<i64: 1, 128>}, {transform_indices = @transform_6, window_bounds = array<i64: 8, 128>}]} {
    %c0_i32 = arith.constant 0 : i32
    %0 = arith.cmpi eq, %arg0, %c0_i32 : i32
    %1 = arith.extui %0 : i1 to i32
    %c0_i32_0 = arith.constant 0 : i32
    %2 = arith.cmpi ne, %1, %c0_i32_0 : i32
    scf.if %2 {
      %c0 = arith.constant 0 : index
      %c0_2 = arith.constant 0 : index
      %6 = vector.load %arg2[%c0, %c0_2] : memref<8x128xf32, #tpu.memory_space<vmem>>, vector<8x128xf32>
      %c0_3 = arith.constant 0 : index
      %c0_4 = arith.constant 0 : index
      %7 = vector.load %arg3[%c0_3, %c0_4] : memref<128x128xf32, #tpu.memory_space<vmem>>, vector<128x128xf32>
      %cst = arith.constant dense<0.000000e+00> : vector<8x128xf32>
      %8 = tpu.matmul %6, %7, %cst {dimension_numbers = #tpu.dot_dimension_numbers<[1], [0], [0], [1], [0, 0, 1, 1], [], []>} : vector<8x128xf32>, vector<128x128xf32>, vector<8x128xf32> -> vector<8x128xf32>
      %c0_i32_5 = arith.constant 0 : i32
      %9 = arith.cmpi eq, %arg1, %c0_i32_5 : i32
      %10 = arith.extui %9 : i1 to i32
      %c0_i32_6 = arith.constant 0 : i32
      %11 = arith.cmpi ne, %10, %c0_i32_6 : i32
      scf.if %11 {
        %cst_20 = arith.constant 0.000000e+00 : f32
        %30 = vector.broadcast %cst_20 : f32 to vector<1x128xf32>
        %c0_21 = arith.constant 0 : index
        %c0_22 = arith.constant 0 : index
        %31 = vector.load %arg9[%c0_21, %c0_22] : memref<1x128xf32, #tpu.memory_space<vmem>>, vector<1x128xf32>
        tpu.vector_store %arg9[%c0_21, %c0_22], %30 {strides = array<i32>} : memref<1x128xf32, #tpu.memory_space<vmem>>, vector<1x128xf32>,
        %cst_23 = arith.constant 0.000000e+00 : f32
        %32 = vector.broadcast %cst_23 : f32 to vector<1x128xf32>
        %c0_24 = arith.constant 0 : index
        %c0_25 = arith.constant 0 : index
        %33 = vector.load %arg10[%c0_24, %c0_25] : memref<1x128xf32, #tpu.memory_space<vmem>>, vector<1x128xf32>
        tpu.vector_store %arg10[%c0_24, %c0_25], %32 {strides = array<i32>} : memref<1x128xf32, #tpu.memory_space<vmem>>, vector<1x128xf32>,
      } else {
      }
      %c0_7 = arith.constant 0 : index
      %c0_8 = arith.constant 0 : index
      %12 = vector.load %arg9[%c0_7, %c0_8] : memref<1x128xf32, #tpu.memory_space<vmem>>, vector<1x128xf32>
      %cst_9 = arith.constant dense<0.000000e+00> : vector<128xf32>
      %13 = vector.multi_reduction <add>, %8, %cst_9 [0] : vector<8x128xf32> to vector<128xf32>
      %14 = vector.shape_cast %13 : vector<128xf32> to vector<1x128xf32>
      %15 = arith.addf %12, %14 : vector<1x128xf32>
      %c0_10 = arith.constant 0 : index
      %c0_11 = arith.constant 0 : index
      %16 = vector.load %arg9[%c0_10, %c0_11] : memref<1x128xf32, #tpu.memory_space<vmem>>, vector<1x128xf32>
      tpu.vector_store %arg9[%c0_10, %c0_11], %15 {strides = array<i32>} : memref<1x128xf32, #tpu.memory_space<vmem>>, vector<1x128xf32>,
      %c0_12 = arith.constant 0 : index
      %c0_13 = arith.constant 0 : index
      %17 = vector.load %arg10[%c0_12, %c0_13] : memref<1x128xf32, #tpu.memory_space<vmem>>, vector<1x128xf32>
      %18 = arith.mulf %8, %8 : vector<8x128xf32>
      %cst_14 = arith.constant dense<0.000000e+00> : vector<128xf32>
      %19 = vector.multi_reduction <add>, %18, %cst_14 [0] : vector<8x128xf32> to vector<128xf32>
      %20 = vector.shape_cast %19 : vector<128xf32> to vector<1x128xf32>
      %21 = arith.addf %17, %20 : vector<1x128xf32>
      %c0_15 = arith.constant 0 : index
      %c0_16 = arith.constant 0 : index
      %22 = vector.load %arg10[%c0_15, %c0_16] : memref<1x128xf32, #tpu.memory_space<vmem>>, vector<1x128xf32>
      tpu.vector_store %arg10[%c0_15, %c0_16], %21 {strides = array<i32>} : memref<1x128xf32, #tpu.memory_space<vmem>>, vector<1x128xf32>,
      %c8_i32 = arith.constant 8 : i32
      %23 = arith.muli %arg1, %c8_i32 : i32
      %24 = tpu.assume_multiple %23, 8 : i32
      %25 = arith.index_cast %24 : i32 to index
      %c0_17 = arith.constant 0 : index
      %26 = vector.load %arg13[%25, %c0_17] : memref<8x128xf32, #tpu.memory_space<vmem>>, vector<8x128xf32>
      tpu.vector_store %arg13[%25, %c0_17], %8 {strides = array<i32>} : memref<8x128xf32, #tpu.memory_space<vmem>>, vector<8x128xf32>,
      %c0_i32_18 = arith.constant 0 : i32
      %27 = arith.cmpi eq, %arg1, %c0_i32_18 : i32
      %28 = arith.extui %27 : i1 to i32
      %c0_i32_19 = arith.constant 0 : i32
      %29 = arith.cmpi ne, %28, %c0_i32_19 : i32
      scf.if %29 {
        %c0_20 = arith.constant 0 : index
        %c0_21 = arith.constant 0 : index
        %30 = vector.load %arg9[%c0_20, %c0_21] : memref<1x128xf32, #tpu.memory_space<vmem>>, vector<1x128xf32>
        %cst_22 = arith.constant 1.250000e-01 : f32
        %31 = vector.broadcast %cst_22 : f32 to vector<1x128xf32>
        %32 = arith.mulf %30, %31 : vector<1x128xf32>
        %c0_23 = arith.constant 0 : index
        %c0_24 = arith.constant 0 : index
        %33 = vector.load %arg10[%c0_23, %c0_24] : memref<1x128xf32, #tpu.memory_space<vmem>>, vector<1x128xf32>
        %cst_25 = arith.constant 1.250000e-01 : f32
        %34 = vector.broadcast %cst_25 : f32 to vector<1x128xf32>
        %35 = arith.mulf %33, %34 : vector<1x128xf32>
        %36 = arith.mulf %32, %32 : vector<1x128xf32>
        %37 = arith.subf %35, %36 : vector<1x128xf32>
        %cst_26 = arith.constant 0.000000e+00 : f32
        %38 = vector.broadcast %cst_26 : f32 to vector<1x128xf32>
        %39 = arith.maximumf %37, %38 : vector<1x128xf32>
        %cst_27 = arith.constant 9.99999974E-6 : f32
        %40 = vector.broadcast %cst_27 : f32 to vector<1x128xf32>
        %41 = arith.addf %39, %40 : vector<1x128xf32>
        %42 = math.rsqrt %41 : vector<1x128xf32>
        %c0_28 = arith.constant 0 : index
        %c0_29 = arith.constant 0 : index
        %43 = vector.load %arg4[%c0_28, %c0_29] : memref<1x128xf32, #tpu.memory_space<vmem>>, vector<1x128xf32>
        %44 = arith.mulf %42, %43 : vector<1x128xf32>
        %c0_30 = arith.constant 0 : index
        %c0_31 = arith.constant 0 : index
        %45 = vector.load %arg11[%c0_30, %c0_31] : memref<1x128xf32, #tpu.memory_space<vmem>>, vector<1x128xf32>
        tpu.vector_store %arg11[%c0_30, %c0_31], %44 {strides = array<i32>} : memref<1x128xf32, #tpu.memory_space<vmem>>, vector<1x128xf32>,
        %c0_32 = arith.constant 0 : index
        %c0_33 = arith.constant 0 : index
        %46 = vector.load %arg5[%c0_32, %c0_33] : memref<1x128xf32, #tpu.memory_space<vmem>>, vector<1x128xf32>
        %47 = arith.mulf %32, %44 : vector<1x128xf32>
        %48 = arith.subf %46, %47 : vector<1x128xf32>
        %c0_34 = arith.constant 0 : index
        %c0_35 = arith.constant 0 : index
        %49 = vector.load %arg12[%c0_34, %c0_35] : memref<1x128xf32, #tpu.memory_space<vmem>>, vector<1x128xf32>
        tpu.vector_store %arg12[%c0_34, %c0_35], %48 {strides = array<i32>} : memref<1x128xf32, #tpu.memory_space<vmem>>, vector<1x128xf32>,
      } else {
      }
    } else {
    }
    %c1_i32 = arith.constant 1 : i32
    %3 = arith.cmpi eq, %arg0, %c1_i32 : i32
    %4 = arith.extui %3 : i1 to i32
    %c0_i32_1 = arith.constant 0 : i32
    %5 = arith.cmpi ne, %4, %c0_i32_1 : i32
    scf.if %5 {
      %c8_i32 = arith.constant 8 : i32
      %6 = arith.muli %arg1, %c8_i32 : i32
      %7 = tpu.assume_multiple %6, 8 : i32
      %8 = arith.index_cast %7 : i32 to index
      %c0 = arith.constant 0 : index
      %9 = vector.load %arg13[%8, %c0] : memref<8x128xf32, #tpu.memory_space<vmem>>, vector<8x128xf32>
      %c0_2 = arith.constant 0 : index
      %c0_3 = arith.constant 0 : index
      %10 = vector.load %arg11[%c0_2, %c0_3] : memref<1x128xf32, #tpu.memory_space<vmem>>, vector<1x128xf32>
      %11 = vector.broadcast %10 : vector<1x128xf32> to vector<8x128xf32>
      %12 = arith.mulf %9, %11 : vector<8x128xf32>
      %c0_4 = arith.constant 0 : index
      %c0_5 = arith.constant 0 : index
      %13 = vector.load %arg12[%c0_4, %c0_5] : memref<1x128xf32, #tpu.memory_space<vmem>>, vector<1x128xf32>
      %14 = vector.broadcast %13 : vector<1x128xf32> to vector<8x128xf32>
      %15 = arith.addf %12, %14 : vector<8x128xf32>
      %cst = arith.constant 0.000000e+00 : f32
      %16 = vector.broadcast %cst : f32 to vector<8x128xf32>
      %17 = arith.maximumf %15, %16 : vector<8x128xf32>
      %c0_6 = arith.constant 0 : index
      %c0_7 = arith.constant 0 : index
      %18 = vector.load %arg6[%c0_6, %c0_7] : memref<128x128xf32, #tpu.memory_space<vmem>>, vector<128x128xf32>
      %cst_8 = arith.constant dense<0.000000e+00> : vector<8x128xf32>
      %19 = tpu.matmul %17, %18, %cst_8 {dimension_numbers = #tpu.dot_dimension_numbers<[1], [0], [0], [1], [0, 0, 1, 1], [], []>} : vector<8x128xf32>, vector<128x128xf32>, vector<8x128xf32> -> vector<8x128xf32>
      %c0_9 = arith.constant 0 : index
      %c0_10 = arith.constant 0 : index
      %20 = vector.load %arg7[%c0_9, %c0_10] : memref<1x128xf32, #tpu.memory_space<vmem>>, vector<1x128xf32>
      %21 = vector.broadcast %20 : vector<1x128xf32> to vector<8x128xf32>
      %22 = arith.addf %19, %21 : vector<8x128xf32>
      %c0_11 = arith.constant 0 : index
      %c0_12 = arith.constant 0 : index
      %23 = vector.load %arg8[%c0_11, %c0_12] : memref<8x128xf32, #tpu.memory_space<vmem>>, vector<8x128xf32>
      tpu.vector_store %arg8[%c0_11, %c0_12], %22 {strides = array<i32>} : memref<8x128xf32, #tpu.memory_space<vmem>>, vector<8x128xf32>,
    } else {
    }
    return
  }
  func.func @transform_0(%arg0: i32, %arg1: i32) -> (i32, i32) {
    %c1_i32 = arith.constant 1 : i32
    %0 = arith.subi %c1_i32, %arg0 : i32
    %1 = arith.muli %0, %arg1 : i32
    %c0_i32 = arith.constant 0 : i32
    %c0_i32_0 = arith.constant 0 : i32
    return %1, %c0_i32 : i32, i32
  }
  func.func @transform_1(%arg0: i32, %arg1: i32) -> (i32, i32) {
    %c0_i32 = arith.constant 0 : i32
    %c0_i32_0 = arith.constant 0 : i32
    %c0_i32_1 = arith.constant 0 : i32
    return %c0_i32, %c0_i32_0 : i32, i32
  }
  func.func @transform_2(%arg0: i32, %arg1: i32) -> (i32, i32) {
    %c0_i32 = arith.constant 0 : i32
    %c0_i32_0 = arith.constant 0 : i32
    %c0_i32_1 = arith.constant 0 : i32
    return %c0_i32, %c0_i32_0 : i32, i32
  }
  func.func @transform_3(%arg0: i32, %arg1: i32) -> (i32, i32) {
    %c0_i32 = arith.constant 0 : i32
    %c0_i32_0 = arith.constant 0 : i32
    %c0_i32_1 = arith.constant 0 : i32
    return %c0_i32, %c0_i32_0 : i32, i32
  }
  func.func @transform_4(%arg0: i32, %arg1: i32) -> (i32, i32) {
    %c0_i32 = arith.constant 0 : i32
    %c0_i32_0 = arith.constant 0 : i32
    %c0_i32_1 = arith.constant 0 : i32
    return %c0_i32, %c0_i32_0 : i32, i32
  }
  func.func @transform_5(%arg0: i32, %arg1: i32) -> (i32, i32) {
    %c0_i32 = arith.constant 0 : i32
    %c0_i32_0 = arith.constant 0 : i32
    %c0_i32_1 = arith.constant 0 : i32
    return %c0_i32, %c0_i32_0 : i32, i32
  }
  func.func @transform_6(%arg0: i32, %arg1: i32) -> (i32, i32) {
    %0 = arith.muli %arg0, %arg1 : i32
    %c0_i32 = arith.constant 0 : i32
    %c0_i32_0 = arith.constant 0 : i32
    return %0, %c0_i32 : i32, i32
  }
}

</mosaic_0001>

<llo_original>
// kernel: projection_head.1
$region0: #{projection_head.1}
  #allocation0 [shape = 'u32[]', space=smem, size = 0x4, offset = 0x4, fixed_abs, tag = 'smem constant byte address 0x4 - core index']
  #allocation1 [shape = 'u32[72,128]{1,0:T(1,128)}', space=vmem, size = 0x9000, scoped, tag = 'internal scratch']
  #allocation2 [shape = 'f32[1,128]{1,0:T(1,128)}', space=vmem, size = 0x200, scoped, tag = 'scratch operand']
  #allocation3 [shape = 'f32[1,128]{1,0:T(1,128)}', space=vmem, size = 0x200, scoped, tag = 'scratch operand']
  #allocation4 [shape = 'f32[1,128]{1,0:T(1,128)}', space=vmem, size = 0x200, scoped, tag = 'scratch operand']
  #allocation5 [shape = 'f32[1,128]{1,0:T(1,128)}', space=vmem, size = 0x200, scoped, tag = 'scratch operand']
  #allocation6 [shape = 'f32[8,128]{1,0:T(8,128)}', space=vmem, size = 0x1000, scoped, tag = 'scratch operand']
  %s0 = inlined_call_operand.vmem [shape: f32[8,128], index: 0, kind: input, shape index: {}]
  %s1 = inlined_call_operand.vmem [shape: f32[128,128], index: 1, kind: input, shape index: {}]
  %s2 = inlined_call_operand.vmem [shape: f32[1,128], index: 2, kind: input, shape index: {}]
  %s3 = inlined_call_operand.vmem [shape: f32[1,128], index: 3, kind: input, shape index: {}]
  %s4 = inlined_call_operand.vmem [shape: f32[128,128], index: 4, kind: input, shape index: {}]
  %s5 = inlined_call_operand.vmem [shape: f32[1,128], index: 5, kind: input, shape index: {}]
  %s6 = inlined_call_operand.hbm [shape: f32[8,128], index: 6, kind: output, shape index: {}]
  %s7 = sld [smem:[#allocation0]]
  $region73: #{projection_head.1} parent=0
    _
  %s9 = ssub.s32 1, %s7
  %s10 = scalar_select 0, %s9, %s7
  $region1: #{projection_head.1} parent=0
    #allocation7 [shape = 'u8[8192]{0}', space=vmem, size = 0x2000, scoped, tag = 'output window, operand 0']
    #allocation8 [shape = 's32[2]{0}', space=sflag, size = 0x8, scoped, tag = 'scoped memory for projection_head.1']
    %11 = vsyncpa [#allocation8], 0
    %s12 = scalar_lea.sflag [#allocation8], 1
    %13 = vsyncpa %s12, 0
    loop: start=0, step=1, limit=4
    $region2: #{projection_head.1} parent=1 // loop_pre_header
      _
    $region3: #{projection_head.1} parent=1 // loop_header
      %s15 = sphi 0, %s19
      %p16 = scmp.ge.s32.totalorder %s15, 4
      %s22 = sphi 0, %s34
      %s23 = sphi 0, %s30
      %s24 = sphi 0, %s22
      %s25 = sphi 0, %s23
      %s26 = sphi 0, %s24
      %s27 = sphi 0, %s25
      %s41 = sphi 0, %s43
      %s44 = sphi 0, %s41
      %s45 = sphi 0, %s44
      %s61 = sphi 0, %s45
      %s65 = sphi 0, %s65
      %s67 = sphi 0, %s65
      %s68 = sphi 0, %s67
      %s82 = sphi 0, %s68
      %s86 = sphi 0, %s86
      %s88 = sphi 0, %s86
      %s89 = sphi 0, %s88
      %s103 = sphi 0, %s89
      %s107 = sphi 0, %s107
      %s109 = sphi 0, %s107
      %s110 = sphi 0, %s109
      %s124 = sphi 0, %s110
      %s128 = sphi 0, %s128
      %s130 = sphi 0, %s128
      %s131 = sphi 0, %s130
      %s145 = sphi 0, %s131
      %s149 = sphi 0, %s149
      %s151 = sphi 0, %s149
      %s152 = sphi 0, %s151
      %s166 = sphi 0, %s152
      %s174 = sphi 0, %s176
      %s177 = sphi 0, %s174
      %s178 = sphi 0, %s177
      %s194 = sphi 0, %s178
    $region4: #{projection_head.1} parent=1 // loop_header_branch
      %18 = sbr.rel (%p16) target = $region8
    $region5: #{projection_head.1} parent=1 // loop_body
      %s20 = ssub.s32 %s15, 1
      %s21 = ssub.s32 %s15, 2
      %s28 = sadd.s32 1, %s23
      %p29 = scmp.ge.s32.totalorder %s28, 1
      %s30 = scalar_select %p29, 0, %s28
      %s31 = sadd.s32 1, %s22
      %s32 = scalar_select %p29, %s31, %s22
      %p33 = scmp.ge.s32.totalorder %s32, 2
      %s34 = scalar_select %p33, 0, %s32
      %s35 = ssub.s32 1, %s22
      %s36 = smul.u32 %s35, %s23
      %s37 = ssub.s32 1, %s34
      %s38 = smul.u32 %s37, %s30
      %s39 = ssub.s32 %s36, %s38
      %p40 = scmp.eq.s32.totalorder %s39, 0
      %s42 = sadd.s32 %s41, 1
      %s43 = scalar_select %p40, %s41, %s42
      %p46 = pneg %p40
      %p47 = scmp.eq.s32.totalorder %s15, 1
      %p48 = por %p46, %p47
      %p49 = scmp.ne.s32.totalorder %s41, %s44
      %p50 = scmp.eq.s32.totalorder %s15, 0
      %p51 = por %p49, %p50
      %p52 = scmp.ne.s32.totalorder %s41, %s44
      %p53 = scmp.eq.s32.totalorder %s20, 1
      %p54 = por %p52, %p53
      %p55 = scmp.ne.s32.totalorder %s44, %s45
      %p56 = scmp.eq.s32.totalorder %s20, 0
      %p57 = por %p55, %p56
      %p58 = scmp.ne.s32.totalorder %s44, %s45
      %p59 = scmp.eq.s32.totalorder %s21, 1
      %p60 = por %p58, %p59
      %p62 = scmp.ne.s32.totalorder %s45, %s61
      %p63 = scmp.eq.s32.totalorder %s21, 0
      %p64 = por %p62, %p63
      %s66 = sadd.s32 %s65, 1
      %p69 = scmp.eq.s32.totalorder %s15, 1
      %p70 = scmp.ne.s32.totalorder %s65, %s67
      %p71 = scmp.eq.s32.totalorder %s15, 0
      %p72 = por %p70, %p71
      %p73 = scmp.ne.s32.totalorder %s65, %s67
      %p74 = scmp.eq.s32.totalorder %s20, 1
      %p75 = por %p73, %p74
      %p76 = scmp.ne.s32.totalorder %s67, %s68
      %p77 = scmp.eq.s32.totalorder %s20, 0
      %p78 = por %p76, %p77
      %p79 = scmp.ne.s32.totalorder %s67, %s68
      %p80 = scmp.eq.s32.totalorder %s21, 1
      %p81 = por %p79, %p80
      %p83 = scmp.ne.s32.totalorder %s68, %s82
      %p84 = scmp.eq.s32.totalorder %s21, 0
      %p85 = por %p83, %p84
      %s87 = sadd.s32 %s86, 1
      %p90 = scmp.eq.s32.totalorder %s15, 1
      %p91 = scmp.ne.s32.totalorder %s86, %s88
      %p92 = scmp.eq.s32.totalorder %s15, 0
      %p93 = por %p91, %p92
      %p94 = scmp.ne.s32.totalorder %s86, %s88
      %p95 = scmp.eq.s32.totalorder %s20, 1
      %p96 = por %p94, %p95
      %p97 = scmp.ne.s32.totalorder %s88, %s89
      %p98 = scmp.eq.s32.totalorder %s20, 0
      %p99 = por %p97, %p98
      %p100 = scmp.ne.s32.totalorder %s88, %s89
      %p101 = scmp.eq.s32.totalorder %s21, 1
      %p102 = por %p100, %p101
      %p104 = scmp.ne.s32.totalorder %s89, %s103
      %p105 = scmp.eq.s32.totalorder %s21, 0
      %p106 = por %p104, %p105
      %s108 = sadd.s32 %s107, 1
      %p111 = scmp.eq.s32.totalorder %s15, 1
      %p112 = scmp.ne.s32.totalorder %s107, %s109
      %p113 = scmp.eq.s32.totalorder %s15, 0
      %p114 = por %p112, %p113
      %p115 = scmp.ne.s32.totalorder %s107, %s109
      %p116 = scmp.eq.s32.totalorder %s20, 1
      %p117 = por %p115, %p116
      %p118 = scmp.ne.s32.totalorder %s109, %s110
      %p119 = scmp.eq.s32.totalorder %s20, 0
      %p120 = por %p118, %p119
      %p121 = scmp.ne.s32.totalorder %s109, %s110
      %p122 = scmp.eq.s32.totalorder %s21, 1
      %p123 = por %p121, %p122
      %p125 = scmp.ne.s32.totalorder %s110, %s124
      %p126 = scmp.eq.s32.totalorder %s21, 0
      %p127 = por %p125, %p126
      %s129 = sadd.s32 %s128, 1
      %p132 = scmp.eq.s32.totalorder %s15, 1
      %p133 = scmp.ne.s32.totalorder %s128, %s130
      %p134 = scmp.eq.s32.totalorder %s15, 0
      %p135 = por %p133, %p134
      %p136 = scmp.ne.s32.totalorder %s128, %s130
      %p137 = scmp.eq.s32.totalorder %s20, 1
      %p138 = por %p136, %p137
      %p139 = scmp.ne.s32.totalorder %s130, %s131
      %p140 = scmp.eq.s32.totalorder %s20, 0
      %p141 = por %p139, %p140
      %p142 = scmp.ne.s32.totalorder %s130, %s131
      %p143 = scmp.eq.s32.totalorder %s21, 1
      %p144 = por %p142, %p143
      %p146 = scmp.ne.s32.totalorder %s131, %s145
      %p147 = scmp.eq.s32.totalorder %s21, 0
      %p148 = por %p146, %p147
      %s150 = sadd.s32 %s149, 1
      %p153 = scmp.eq.s32.totalorder %s15, 1
      %p154 = scmp.ne.s32.totalorder %s149, %s151
      %p155 = scmp.eq.s32.totalorder %s15, 0
      %p156 = por %p154, %p155
      %p157 = scmp.ne.s32.totalorder %s149, %s151
      %p158 = scmp.eq.s32.totalorder %s20, 1
      %p159 = por %p157, %p158
      %p160 = scmp.ne.s32.totalorder %s151, %s152
      %p161 = scmp.eq.s32.totalorder %s20, 0
      %p162 = por %p160, %p161
      %p163 = scmp.ne.s32.totalorder %s151, %s152
      %p164 = scmp.eq.s32.totalorder %s21, 1
      %p165 = por %p163, %p164
      %p167 = scmp.ne.s32.totalorder %s152, %s166
      %p168 = scmp.eq.s32.totalorder %s21, 0
      %p169 = por %p167, %p168
      %s170 = smul.u32 %s22, %s23
      %s171 = smul.u32 %s34, %s30
      %s172 = ssub.s32 %s170, %s171
      %p173 = scmp.eq.s32.totalorder %s172, 0
      %s175 = sadd.s32 %s174, 1
      %s176 = scalar_select %p173, %s174, %s175
      %p179 = pneg %p173
      %p180 = scmp.eq.s32.totalorder %s15, 1
      %p181 = por %p179, %p180
      %p182 = scmp.ne.s32.totalorder %s174, %s177
      %p183 = scmp.eq.s32.totalorder %s15, 0
      %p184 = por %p182, %p183
      %p185 = scmp.ne.s32.totalorder %s174, %s177
      %p186 = scmp.eq.s32.totalorder %s20, 1
      %p187 = por %p185, %p186
      %p188 = scmp.ne.s32.totalorder %s177, %s178
      %p189 = scmp.eq.s32.totalorder %s20, 0
      %p190 = por %p188, %p189
      %p191 = scmp.ne.s32.totalorder %s177, %s178
      %p192 = scmp.eq.s32.totalorder %s21, 1
      %p193 = por %p191, %p192
      %p195 = scmp.ne.s32.totalorder %s178, %s194
      %p196 = scmp.eq.s32.totalorder %s21, 0
      %p197 = por %p195, %p196
      %p198 = scmp.le.s32.totalorder 1, %s15
      %p199 = scmp.lt.s32.totalorder %s15, 3
      %p200 = pnand %p198, %p199
      %p201 = pneg %p200
      // Predicated region
      $region9: #{projection_head.1} parent=5 // pred_check
        _
      $region10: #{projection_head.1} parent=5 // pred_check_branch
        %203 = sbr.rel (%p200) target = $region12
      $region11: #{projection_head.1} parent=5 // pred_region
        %s204 = ssub.s32 %s15, 1
        // Predicated region
        $region13: #{projection_head.1} parent=11 // pred_check
          %p205 = pneg %p78
        $region14: #{projection_head.1} parent=11 // pred_check_branch
          %207 = sbr.rel (%p205) target = $region16
        $region15: #{projection_head.1} parent=11 // pred_region
          _
        $region16: #{projection_head.1} parent=11 // pred_fallthru
          _
        // Predicated region
        $region17: #{projection_head.1} parent=11 // pred_check
          %p208 = pneg %p99
        $region18: #{projection_head.1} parent=11 // pred_check_branch
          %210 = sbr.rel (%p208) target = $region20
        $region19: #{projection_head.1} parent=11 // pred_region
          _
        $region20: #{projection_head.1} parent=11 // pred_fallthru
          _
        // Predicated region
        $region21: #{projection_head.1} parent=11 // pred_check
          %p211 = pneg %p120
        $region22: #{projection_head.1} parent=11 // pred_check_branch
          %213 = sbr.rel (%p211) target = $region24
        $region23: #{projection_head.1} parent=11 // pred_region
          _
        $region24: #{projection_head.1} parent=11 // pred_fallthru
          _
        // Predicated region
        $region25: #{projection_head.1} parent=11 // pred_check
          %p214 = pneg %p141
        $region26: #{projection_head.1} parent=11 // pred_check_branch
          %216 = sbr.rel (%p214) target = $region28
        $region27: #{projection_head.1} parent=11 // pred_region
          _
        $region28: #{projection_head.1} parent=11 // pred_fallthru
          _
        // Predicated region
        $region29: #{projection_head.1} parent=11 // pred_check
          %p217 = pneg %p162
        $region30: #{projection_head.1} parent=11 // pred_check_branch
          %219 = sbr.rel (%p217) target = $region32
        $region31: #{projection_head.1} parent=11 // pred_region
          _
        $region32: #{projection_head.1} parent=11 // pred_fallthru
          _
      $region12: #{projection_head.1} parent=5 // pred_fallthru
        _
      %p220 = scmp.lt.s32.totalorder %s15, 2
      // Predicated region
      $region33: #{projection_head.1} parent=5 // pred_check
        %p221 = pneg %p220
      $region34: #{projection_head.1} parent=5 // pred_check_branch
        %223 = sbr.rel (%p221) target = $region36
      $region35: #{projection_head.1} parent=5 // pred_region
        // Predicated region
        $region37: #{projection_head.1} parent=35 // pred_check
          %p224 = pneg %p51
        $region38: #{projection_head.1} parent=35 // pred_check_branch
          %226 = sbr.rel (%p224) target = $region40
        $region39: #{projection_head.1} parent=35 // pred_region
          %s227 = ssub.s32 1, %s22
          %s228 = smul.u32 %s227, %s23
          %p229 = scmp.lt.s32.totalorder %s228, 0
          %s230 = scalar_select %p229, %s228, 0
          %s231 = smul.addr %s230, 8
          %s232 = scalar_lea.vmem %s0, %s231
          %s233 = ssub.s32 1, %s22
          %s234 = smul.u32 %s233, %s23
        $region40: #{projection_head.1} parent=35 // pred_fallthru
          _
      $region36: #{projection_head.1} parent=5 // pred_fallthru
        _
      %p235 = scmp.le.s32.totalorder 1, %s15
      %p236 = scmp.lt.s32.totalorder %s15, 3
      %p237 = pnand %p235, %p236
      %p238 = pneg %p237
      // Predicated region
      $region41: #{projection_head.1} parent=5 // pred_check
        _
      $region42: #{projection_head.1} parent=5 // pred_check_branch
        %240 = sbr.rel (%p237) target = $region44
      $region43: #{projection_head.1} parent=5 // pred_region
        %s241 = ssub.s32 %s15, 1
        %s242 = ssub.s32 1, %s24
        %s243 = smul.u32 %s242, %s25
        %p244 = scmp.lt.s32.totalorder %s243, 0
        %s245 = scalar_select %p244, %s243, 0
        %s246 = smul.addr %s245, 8
        %s247 = scalar_lea.vmem %s0, %s246
        %p248 = pneg %p57
        %p249 = pneg %p54
        %p250 = pneg %p78
        %p251 = pneg %p75
        %p252 = pneg %p99
        %p253 = pneg %p96
        %p254 = pneg %p120
        %p255 = pneg %p117
        %p256 = pneg %p141
        %p257 = pneg %p138
        %p258 = pneg %p162
        %p259 = pneg %p159
        %p260 = pneg %p190
        %p261 = pneg %p187
        %s262 = sand.u32 %s177, 1
        %s263 = scalar_lea.sflag [#allocation8], %s262
        %s264 = sand.u32 %s177, 1
        %s265 = smul.addr %s264, 8
        %s266 = scalar_lea.vmem [#allocation7], %s265
        %s267 = ssub.s32 1, %s24
        %s268 = smul.u32 %s267, %s25
        %p269 = scmp.lt.s32.totalorder %s268, 0
        %s270 = scalar_select %p269, %s268, 0
        %s271 = smul.addr %s270, 8
        %s272 = scalar_lea.vmem %s0, %s271
        %s273 = ssub.s32 1, %s24
        %s274 = smul.u32 %s273, %s25
        %s275 = smul.u32 %s24, %s25
        %p276 = scmp.eq.s32.totalorder %s24, 0
        // Predicated region
        $region45: #{projection_head.1} parent=43 // pred_check
          %p277 = pneg %p276
        $region46: #{projection_head.1} parent=43 // pred_check_branch
          %279 = sbr.rel (%p277) target = $region48
        $region47: #{projection_head.1} parent=43 // pred_region
          %v280 = vld [vmem:[%s272] sm:$0xff]
          %v281 = vld [vmem:[%s1] sm:$0xff]
          %v282 = vld [vmem:[%s1 + $0x8] sm:$0xff]
          %v283 = vld [vmem:[%s1 + $0x10] sm:$0xff]
          %v284 = vld [vmem:[%s1 + $0x18] sm:$0xff]
          %v285 = vld [vmem:[%s1 + $0x20] sm:$0xff]
          %v286 = vld [vmem:[%s1 + $0x28] sm:$0xff]
          %v287 = vld [vmem:[%s1 + $0x30] sm:$0xff]
          %v288 = vld [vmem:[%s1 + $0x38] sm:$0xff]
          %v289 = vld [vmem:[%s1 + $0x40] sm:$0xff]
          %v290 = vld [vmem:[%s1 + $0x48] sm:$0xff]
          %v291 = vld [vmem:[%s1 + $0x50] sm:$0xff]
          %v292 = vld [vmem:[%s1 + $0x58] sm:$0xff]
          %v293 = vld [vmem:[%s1 + $0x60] sm:$0xff]
          %v294 = vld [vmem:[%s1 + $0x68] sm:$0xff]
          %v295 = vld [vmem:[%s1 + $0x70] sm:$0xff]
          %v296 = vld [vmem:[%s1 + $0x78] sm:$0xff]
          %297 = vmatpush.msra.mxu0 %v296
          %298 = vmatpush.msra.mxu0 %v295
          %299 = vmatpush.msra.mxu0 %v294
          %300 = vmatpush.msra.mxu0 %v293
          %301 = vmatpush.msra.mxu0 %v292
          %302 = vmatpush.msra.mxu0 %v291
          %303 = vmatpush.msra.mxu0 %v290
          %304 = vmatpush.msra.mxu0 %v289
          %305 = vmatpush.msra.mxu0 %v288
          %306 = vmatpush.msra.mxu0 %v287
          %307 = vmatpush.msra.mxu0 %v286
          %308 = vmatpush.msra.mxu0 %v285
          %309 = vmatpush.msra.mxu0 %v284
          %310 = vmatpush.msra.mxu0 %v283
          %311 = vmatpush.msra.mxu0 %v282
          %312 = vmatpush.msra.mxu0 %v281
          %313 = vmatmul.f32.gmra.mxu0 %v280
          %v314 = vpop.f32.mrf.mxu0
          %v315 = vadd.f32 0.0, %v314
          %316 = vdwg.mxu0
          %p317 = scmp.eq.s32.totalorder %s25, 0
          // Predicated region
          $region49: #{projection_head.1} parent=47 // pred_check
            %p318 = pneg %p317
          $region50: #{projection_head.1} parent=47 // pred_check_branch
            %320 = sbr.rel (%p318) target = $region52
          $region51: #{projection_head.1} parent=47 // pred_region
            %321 = vst [vmem:[#allocation2] sm:$0x1] 0.0
            %322 = vst [vmem:[#allocation3] sm:$0x1] 0.0
          $region52: #{projection_head.1} parent=47 // pred_fallthru
            _
          %v323 = vld [vmem:[#allocation2] sm:$0x1]
          %v324 = vrot.slane %v315, 4
          %v325 = vadd.f32 %v315, %v324
          %v326 = vrot.slane %v325, 2
          %v327 = vadd.f32 %v325, %v326
          %v328 = vrot.slane %v327, 1
          %v329 = vadd.f32 %v327, %v328
          %v330 = vadd.f32 %v323, %v329
          %331 = vst [vmem:[#allocation2] sm:$0x1] %v330
          %v332 = vld [vmem:[#allocation3] sm:$0x1]
          %v333 = vmul.f32 %v315, %v315
          %v334 = vrot.slane %v333, 4
          %v335 = vadd.f32 %v333, %v334
          %v336 = vrot.slane %v335, 2
          %v337 = vadd.f32 %v335, %v336
          %v338 = vrot.slane %v337, 1
          %v339 = vadd.f32 %v337, %v338
          %v340 = vadd.f32 %v332, %v339
          %341 = vst [vmem:[#allocation3] sm:$0x1] %v340
          %s342 = smul.u32 %s25, 8
          %s343 = scalar_lea.vmem [#allocation6], %s342
          %344 = vst [vmem:[%s343] sm:$0xff] %v315
          // Predicated region
          $region53: #{projection_head.1} parent=47 // pred_check
            %p345 = pneg %p317
          $region54: #{projection_head.1} parent=47 // pred_check_branch
            %347 = sbr.rel (%p345) target = $region56
          $region55: #{projection_head.1} parent=47 // pred_region
            %v348 = vld [vmem:[#allocation2] sm:$0x1]
            %v349 = vmul.f32 %v348, 0.125
            %v350 = vld [vmem:[#allocation3] sm:$0x1]
            %v351 = vmul.f32 %v350, 0.125
            %v352 = vmul.f32 %v349, %v349
            %v353 = vsub.f32 %v351, %v352
            %v354 = vmax.f32 %v353, 0.0
            %v355 = vadd.f32 %v354, 1e-05
            %v356 = vrsqrt.pop %v355
            %v357 = vmul.f32 %v356, %v355
            %v358 = vmul.f32 %v357, %v356
            %v359 = vmul.f32 0.5, %v358
            %v360 = vsub.f32 1.5, %v359
            %v361 = vmul.f32 %v356, %v360
            %vm362 = vweird.f32 %v355
            %vm363 = vweird.f32 %v356
            %vm364 = vmor %vm362, %vm363
            %v365 = vsel %vm364, %v356, %v361
            %v366 = vld [vmem:[%s2] sm:$0x1]
            %v367 = vmul.f32 %v365, %v366
            %368 = vst [vmem:[#allocation4] sm:$0x1] %v367
            %v369 = vld [vmem:[%s3] sm:$0x1]
            %v370 = vmul.f32 %v349, %v367
            %v371 = vsub.f32 %v369, %v370
            %372 = vst [vmem:[#allocation5] sm:$0x1] %v371
          $region56: #{projection_head.1} parent=47 // pred_fallthru
            _
        $region48: #{projection_head.1} parent=43 // pred_fallthru
          _
        %p373 = scmp.eq.s32.totalorder %s24, 1
        // Predicated region
        $region57: #{projection_head.1} parent=43 // pred_check
          %p374 = pneg %p373
        $region58: #{projection_head.1} parent=43 // pred_check_branch
          %376 = sbr.rel (%p374) target = $region60
        $region59: #{projection_head.1} parent=43 // pred_region
          %s377 = smul.u32 %s25, 8
          %s378 = scalar_lea.vmem [#allocation6], %s377
          %v379 = vld [vmem:[%s378] sm:$0xff]
          %v380 = vld [vmem:[#allocation4] sm:$0x1]
          %v382 = vperm.slane %v380, 0
          %v384 = vmul.f32 %v379, %v382
          %v385 = vld [vmem:[#allocation5] sm:$0x1]
          %v387 = vperm.slane %v385, 0
          %v389 = vadd.f32 %v384, %v387
          %v390 = vmax.f32 %v389, 0.0
          %v391 = vld [vmem:[%s4] sm:$0xff]
          %v392 = vld [vmem:[%s4 + $0x8] sm:$0xff]
          %v393 = vld [vmem:[%s4 + $0x10] sm:$0xff]
          %v394 = vld [vmem:[%s4 + $0x18] sm:$0xff]
          %v395 = vld [vmem:[%s4 + $0x20] sm:$0xff]
          %v396 = vld [vmem:[%s4 + $0x28] sm:$0xff]
          %v397 = vld [vmem:[%s4 + $0x30] sm:$0xff]
          %v398 = vld [vmem:[%s4 + $0x38] sm:$0xff]
          %v399 = vld [vmem:[%s4 + $0x40] sm:$0xff]
          %v400 = vld [vmem:[%s4 + $0x48] sm:$0xff]
          %v401 = vld [vmem:[%s4 + $0x50] sm:$0xff]
          %v402 = vld [vmem:[%s4 + $0x58] sm:$0xff]
          %v403 = vld [vmem:[%s4 + $0x60] sm:$0xff]
          %v404 = vld [vmem:[%s4 + $0x68] sm:$0xff]
          %v405 = vld [vmem:[%s4 + $0x70] sm:$0xff]
          %v406 = vld [vmem:[%s4 + $0x78] sm:$0xff]
          %v407 = vld [vmem:[%s5] sm:$0x1]
          %v409 = vperm.slane %v407, 0
          %411 = vmatpush.msra.mxu0 %v406
          %412 = vmatpush.msra.mxu0 %v405
          %413 = vmatpush.msra.mxu0 %v404
          %414 = vmatpush.msra.mxu0 %v403
          %415 = vmatpush.msra.mxu0 %v402
          %416 = vmatpush.msra.mxu0 %v401
          %417 = vmatpush.msra.mxu0 %v400
          %418 = vmatpush.msra.mxu0 %v399
          %419 = vmatpush.msra.mxu0 %v398
          %420 = vmatpush.msra.mxu0 %v397
          %421 = vmatpush.msra.mxu0 %v396
          %422 = vmatpush.msra.mxu0 %v395
          %423 = vmatpush.msra.mxu0 %v394
          %424 = vmatpush.msra.mxu0 %v393
          %425 = vmatpush.msra.mxu0 %v392
          %426 = vmatpush.msra.mxu0 %v391
          %427 = vmatmul.f32.gmra.mxu0 %v390
          %v428 = vpop.f32.mrf.mxu0
          %v429 = vadd.f32 %v409, %v428
          %430 = vdwg.mxu0
          %431 = vst [vmem:[%s266] sm:$0xff] %v429
        $region60: #{projection_head.1} parent=43 // pred_fallthru
          _
        %s432 = sand.u32 %s177, 1
        %s433 = scalar_lea.sflag [#allocation8], %s432
        %s434 = sand.u32 %s177, 1
        %s435 = smul.addr %s434, 8
        %s436 = scalar_lea.vmem [#allocation7], %s435
        // Predicated region
        $region61: #{projection_head.1} parent=43 // pred_check
          %p437 = pneg %p187
        $region62: #{projection_head.1} parent=43 // pred_check_branch
          %439 = sbr.rel (%p437) target = $region64
        $region63: #{projection_head.1} parent=43 // pred_region
          %s440 = smul.u32 %s24, %s25
          %442 = vsyncadd %s433, 0
          %s443 = smul.addr %s440, 8
          %s444 = scalar_lea.hbm %s6, %s443
          %s446 = sshll.u32 %s436, 4
          %s447 = int_to_ptr.vmem [resolvable:$true] %s446
          %s448 = sshll.u32 %s444, 4
          %s449 = int_to_ptr.hbm [resolvable:$true] %s448
          %451 = dma.vmem_to_hbm [thread:$0]  %s447, 128, %s449, %s433
        $region64: #{projection_head.1} parent=43 // pred_fallthru
          _
      $region44: #{projection_head.1} parent=5 // pred_fallthru
        _
      %p452 = scmp.le.s32.totalorder 2, %s15
      // Predicated region
      $region65: #{projection_head.1} parent=5 // pred_check
        %p453 = pneg %p452
      $region66: #{projection_head.1} parent=5 // pred_check_branch
        %455 = sbr.rel (%p453) target = $region68
      $region67: #{projection_head.1} parent=5 // pred_region
        %s456 = ssub.s32 %s15, 2
        // Predicated region
        $region69: #{projection_head.1} parent=67 // pred_check
          %p457 = pneg %p193
        $region70: #{projection_head.1} parent=67 // pred_check_branch
          %459 = sbr.rel (%p457) target = $region72
        $region71: #{projection_head.1} parent=67 // pred_region
          %s460 = sand.u32 %s178, 1
          %s461 = scalar_lea.sflag [#allocation8], %s460
          %s462 = sand.u32 %s178, 1
          %s463 = smul.addr %s462, 8
          %s464 = scalar_lea.vmem [#allocation7], %s463
          %466 = dma.done %s461, 128
        $region72: #{projection_head.1} parent=67 // pred_fallthru
          _
      $region68: #{projection_head.1} parent=5 // pred_fallthru
        _
    $region6: #{projection_head.1} parent=1 // loop_footer
      %s19 = sadd.s32 1, %s15
    $region7: #{projection_head.1} parent=1 // loop_footer_branch
      %14 = sbr.rel target = $region3
    $region8: #{projection_head.1} parent=1 // loop_exit
      _
    %467 = vsyncpa [#allocation8], 1
    %s468 = scalar_lea.sflag [#allocation8], 1
    %469 = vsyncpa %s468, 1

</llo_original>
